<compile_context>
chip_gen: v5e
topology: v5e:2x2
jax: 0.10.0
libtpu: 0.0.40
codegen_flags: <defaults>
</compile_context>

<pallas_src>
import functools
import math

import jax
import jax.numpy as jnp
from jax.experimental import pallas as pl
from jax.experimental.pallas import tpu as pltpu


# ---------------------------------------------------------------------------
# tiling helpers
# ---------------------------------------------------------------------------

def _round_up(x, m):
    return ((x + m - 1) // m) * m


def _pick_row_tile(m, k, n, itemsize, target=256, vmem_budget=20 * 1024 * 1024):
    """Pick the token-row tile size.

    Big tiles keep the MXU's 128/256 systolic rows busy and amortize the
    ~0.35us per-grid-step overhead; the tile is capped so the double-buffered
    working set (x/res/out tiles plus the grid-invariant weight, which Pallas
    still double-buffers) stays comfortably under v7x's 64 MiB VMEM / 32 MiB
    default scoped limit (and therefore also fits v5e/v6e).
    """
    sub = max(8, 32 // max(itemsize, 1))  # 8 rows for f32, 16 for bf16 sublane packing
    tm = min(_round_up(target, sub), _round_up(m, sub))

    def working_set(t):
        return itemsize * (2 * t * k + 2 * k * n + 4 * t * n + 8 * n)

    while tm > sub and working_set(tm) > vmem_budget:
        tm = max(sub, _round_up(tm // 2, sub))
    return tm


# ---------------------------------------------------------------------------
# kernel 1: generic Linear (+ optional ReLU)
# ---------------------------------------------------------------------------

def _linear_kernel(x_ref, w_ref, b_ref, o_ref, *, activation):
    # Native-dtype operands straight into the MXU, f32 accumulation.
    y = jnp.dot(x_ref[...], w_ref[...], preferred_element_type=jnp.float32)
    y = y + b_ref[...].astype(jnp.float32)
    if activation == "relu":
        y = jnp.maximum(y, 0.0)
    o_ref[...] = y.astype(o_ref.dtype)


def pallas_linear(x2, w, b, *, activation=None, tile_m=256):
    """x2: [M, K]; w: [K, N] (already transposed from PyTorch's [N, K]); b: [N]."""
    M, K = x2.shape
    Kw, N = w.shape
    assert Kw == K
    itemsize = jnp.dtype(x2.dtype).itemsize
    tm = _pick_row_tile(M, K, N, itemsize, target=tile_m)
    Mp = _round_up(M, tm)
    xp = jnp.pad(x2, ((0, Mp - M), (0, 0))) if Mp != M else x2

    out = pl.pallas_call(
        functools.partial(_linear_kernel, activation=activation),
        out_shape=jax.ShapeDtypeStruct((Mp, N), x2.dtype),
        grid_spec=pltpu.PrefetchScalarGridSpec(
            num_scalar_prefetch=0,
            grid=(Mp // tm,),
            in_specs=[
                pl.BlockSpec((tm, K), lambda i: (i, 0)),   # x row tile
                pl.BlockSpec((K, N), lambda i: (0, 0)),    # full weight (grid-invariant)
                pl.BlockSpec((1, N), lambda i: (0, 0)),    # bias
            ],
            out_specs=pl.BlockSpec((tm, N), lambda i: (i, 0)),
        ),
        compiler_params=pltpu.CompilerParams(dimension_semantics=("parallel",)),
    )(xp, w, b.reshape(1, N))
    return out[:M] if Mp != M else out


# ---------------------------------------------------------------------------
# kernel 2: relative-position attention core (per batch, per head)
# ---------------------------------------------------------------------------

def _rel_attention_kernel(q_ref, k_ref, v_ref, rk_ref, rvt_ref, o_ref, *, inv_scale):
    q = q_ref[...].astype(jnp.float32)        # (S, d)
    k = k_ref[...].astype(jnp.float32)        # (S, d)
    v = v_ref[...]                            # (S, d) native dtype for the MXU
    rk = rk_ref[...].astype(jnp.float32)      # (S_q, S_k, d)
    rvt = rvt_ref[...].astype(jnp.float32)    # (S_q, d, S_k)  (pre-transposed in wrapper)

    # content-content scores: q @ k^T on the MXU
    attn1 = jax.lax.dot_general(q, k, (((1,), (1,)), ((), ())),
                                preferred_element_type=jnp.float32)      # (S, S)
    # content-position scores: small head_dim -> VPU broadcast + lane reduce
    attn2 = jnp.sum(q[:, None, :] * rk, axis=-1)                          # (S, S)
    scores = (attn1 + attn2) * inv_scale

    # softmax in f32 (dropout on the probs is inference-mode identity)
    m = jnp.max(scores, axis=-1, keepdims=True)
    e = jnp.exp(scores - m)
    p = e / jnp.sum(e, axis=-1, keepdims=True)

    w1 = jnp.dot(p.astype(v.dtype), v, preferred_element_type=jnp.float32)  # (S, d)
    w2 = jnp.sum(p[:, None, :] * rvt, axis=-1)                              # (S, d)
    o_ref[...] = (w1 + w2).astype(o_ref.dtype)


def pallas_relative_attention(qh, kh, vh, rk_emb, rvt_emb, *, scale):
    """qh/kh/vh: [B, nH, S, d]; rk_emb: [S, S, d]; rvt_emb: [S, d, S]."""
    B, nH, S, d = qh.shape
    qkv_spec = pl.BlockSpec((None, None, S, d), lambda b, h: (b, h, 0, 0))
    return pl.pallas_call(
        functools.partial(_rel_attention_kernel, inv_scale=1.0 / scale),
        out_shape=jax.ShapeDtypeStruct((B, nH, S, d), qh.dtype),
        grid_spec=pltpu.PrefetchScalarGridSpec(
            num_scalar_prefetch=0,
            grid=(B, nH),
            in_specs=[
                qkv_spec, qkv_spec, qkv_spec,
                pl.BlockSpec((S, S, d), lambda b, h: (0, 0, 0)),
                pl.BlockSpec((S, d, S), lambda b, h: (0, 0, 0)),
            ],
            out_specs=pl.BlockSpec((None, None, S, d), lambda b, h: (b, h, 0, 0)),
        ),
        compiler_params=pltpu.CompilerParams(
            dimension_semantics=("parallel", "parallel")),
    )(qh, kh, vh, rk_emb, rvt_emb)


# ---------------------------------------------------------------------------
# kernel 3: fused Linear + dropout(identity) + residual + LayerNorm
# ---------------------------------------------------------------------------

def _dense_res_ln_kernel(x_ref, w_ref, b_ref, res_ref, g_ref, be_ref, o_ref, *, eps):
    h = jnp.dot(x_ref[...], w_ref[...], preferred_element_type=jnp.float32)
    h = h + b_ref[...].astype(jnp.float32)
    # Dropout: inference-mode identity.
    h = h + res_ref[...].astype(jnp.float32)
    # LayerNorm (biased variance, eps=1e-12) in f32 on the f32 accumulator.
    u = jnp.mean(h, axis=-1, keepdims=True)
    dlt = h - u
    s = jnp.mean(dlt * dlt, axis=-1, keepdims=True)
    y = dlt * jax.lax.rsqrt(s + eps)
    y = g_ref[...].astype(jnp.float32) * y + be_ref[...].astype(jnp.float32)
    o_ref[...] = y.astype(o_ref.dtype)


def pallas_dense_residual_layernorm(x2, res2, w, b, gamma, beta, *, eps=1e-12, tile_m=256):
    """x2: [M, K]; res2: [M, N]; w: [K, N]; b/gamma/beta: [N]."""
    M, K = x2.shape
    Kw, N = w.shape
    assert Kw == K and res2.shape == (M, N)
    itemsize = jnp.dtype(x2.dtype).itemsize
    tm = _pick_row_tile(M, K, N, itemsize, target=tile_m)
    Mp = _round_up(M, tm)
    if Mp != M:
        x2 = jnp.pad(x2, ((0, Mp - M), (0, 0)))
        res2 = jnp.pad(res2, ((0, Mp - M), (0, 0)))

    out = pl.pallas_call(
        functools.partial(_dense_res_ln_kernel, eps=eps),
        out_shape=jax.ShapeDtypeStruct((Mp, N), res2.dtype),
        grid_spec=pltpu.PrefetchScalarGridSpec(
            num_scalar_prefetch=0,
            grid=(Mp // tm,),
            in_specs=[
                pl.BlockSpec((tm, K), lambda i: (i, 0)),   # hidden_states tile
                pl.BlockSpec((K, N), lambda i: (0, 0)),    # dense weight
                pl.BlockSpec((1, N), lambda i: (0, 0)),    # dense bias
                pl.BlockSpec((tm, N), lambda i: (i, 0)),   # residual tile
                pl.BlockSpec((1, N), lambda i: (0, 0)),    # LN gamma
                pl.BlockSpec((1, N), lambda i: (0, 0)),    # LN beta
            ],
            out_specs=pl.BlockSpec((tm, N), lambda i: (i, 0)),
        ),
        compiler_params=pltpu.CompilerParams(dimension_semantics=("parallel",)),
    )(x2, w, b.reshape(1, N), res2, gamma.reshape(1, N), beta.reshape(1, N))
    return out[:M] if Mp != M else out


# ---------------------------------------------------------------------------
# RelativePosition lookup (tiny (2*max+1, d) table -> done in the JAX wrapper)
# ---------------------------------------------------------------------------

def relative_position_embeddings(table, length_q, length_k, max_rel):
    rq = jnp.arange(length_q)
    rk = jnp.arange(length_k)
    dist = rk[None, :] - rq[:, None]
    idx = jnp.clip(dist, -max_rel, max_rel) + max_rel
    return jnp.take(table, idx, axis=0)  # (length_q, length_k, d)


# ---------------------------------------------------------------------------
# full Encoder forward (Pallas path)
# ---------------------------------------------------------------------------

def encoder_forward(params, hidden_states, attention_mask=None):
    # NOTE: attention_mask is accepted for API parity but unused, exactly like the
    # PyTorch reference (SelfAttention calls MHA without a mask).
    B, S, H = hidden_states.shape
    nH = params["num_heads"]
    d = H // nH
    x2 = hidden_states.reshape(B * S, H)

    # --- SelfAttention projections ---
    q0 = pallas_linear(x2, params["q_w"], params["q_b"])
    k0 = pallas_linear(x2, params["k_w"], params["k_b"])
    v0 = pallas_linear(x2, params["v_w"], params["v_b"])

    # --- MultiHeadAttention inner projections ---
    q = pallas_linear(q0, params["fcq_w"], params["fcq_b"])
    k = pallas_linear(k0, params["fck_w"], params["fck_b"])
    v = pallas_linear(v0, params["fcv_w"], params["fcv_b"])

    qh = q.reshape(B, S, nH, d).transpose(0, 2, 1, 3)
    kh = k.reshape(B, S, nH, d).transpose(0, 2, 1, 3)
    vh = v.reshape(B, S, nH, d).transpose(0, 2, 1, 3)

    rk_emb = relative_position_embeddings(params["rel_k"], S, S, params["max_rel"])
    rv_emb = relative_position_embeddings(params["rel_v"], S, S, params["max_rel"])
    rvt_emb = jnp.transpose(rv_emb, (0, 2, 1))  # (S, d, S): kernel reduces on the last axis

    ctx = pallas_relative_attention(qh, kh, vh, rk_emb, rvt_emb, scale=math.sqrt(d))
    ctx2 = ctx.transpose(0, 2, 1, 3).reshape(B * S, H)

    mha = pallas_linear(ctx2, params["fco_w"], params["fco_b"])

    # --- SelfOutput: dense + dropout + residual(+input) + LayerNorm (fused) ---
    attn_out = pallas_dense_residual_layernorm(
        mha, x2, params["so_w"], params["so_b"], params["so_g"], params["so_be"])

    # --- Intermediate: dense + ReLU ---
    inter = pallas_linear(attn_out, params["int_w"], params["int_b"], activation="relu")

    # --- Output: dense + dropout + residual(+attn_out) + LayerNorm (fused) ---
    out = pallas_dense_residual_layernorm(
        inter, attn_out, params["out_w"], params["out_b"], params["out_g"], params["out_be"])

    return out.reshape(B, S, H)


# ---------------------------------------------------------------------------
# pure-JAX reference (mirrors the PyTorch module, eval mode)
# ---------------------------------------------------------------------------

def reference_encoder(params, hidden_states):
    B, S, H = hidden_states.shape
    nH = params["num_heads"]
    d = H // nH
    prec = jax.lax.Precision.HIGHEST

    def lin(x, w, b):
        return jnp.dot(x, w, precision=prec) + b

    def ln(x, g, be, eps=1e-12):
        u = jnp.mean(x, axis=-1, keepdims=True)
        s = jnp.mean((x - u) ** 2, axis=-1, keepdims=True)
        return g * ((x - u) / jnp.sqrt(s + eps)) + be

    x = hidden_states
    q = lin(lin(x, params["q_w"], params["q_b"]), params["fcq_w"], params["fcq_b"])
    k = lin(lin(x, params["k_w"], params["k_b"]), params["fck_w"], params["fck_b"])
    v = lin(lin(x, params["v_w"], params["v_b"]), params["fcv_w"], params["fcv_b"])

    qh = q.reshape(B, S, nH, d).transpose(0, 2, 1, 3)
    kh = k.reshape(B, S, nH, d).transpose(0, 2, 1, 3)
    vh = v.reshape(B, S, nH, d).transpose(0, 2, 1, 3)

    rk_emb = relative_position_embeddings(params["rel_k"], S, S, params["max_rel"])
    rv_emb = relative_position_embeddings(params["rel_v"], S, S, params["max_rel"])

    attn1 = jnp.einsum("bhqd,bhkd->bhqk", qh, kh, precision=prec)
    attn2 = jnp.einsum("bhqd,qkd->bhqk", qh, rk_emb, precision=prec)
    attn = jax.nn.softmax((attn1 + attn2) / math.sqrt(d), axis=-1)

    w1 = jnp.einsum("bhqk,bhkd->bhqd", attn, vh, precision=prec)
    w2 = jnp.einsum("bhqk,qkd->bhqd", attn, rv_emb, precision=prec)
    ctx = (w1 + w2).transpose(0, 2, 1, 3).reshape(B, S, H)
    mha = lin(ctx, params["fco_w"], params["fco_b"])

    attn_out = ln(lin(mha, params["so_w"], params["so_b"]) + x,
                  params["so_g"], params["so_be"])
    inter = jax.nn.relu(lin(attn_out, params["int_w"], params["int_b"]))
    out = ln(lin(inter, params["out_w"], params["out_b"]) + attn_out,
             params["out_g"], params["out_be"])
    return out


# ---------------------------------------------------------------------------
# demo / self-test
# ---------------------------------------------------------------------------

if __name__ == "__main__":
    B, S = 2, 8
    H, I_SZ = 32, 64
    N_HEADS, MAX_REL = 4, 2
    d = H // N_HEADS

    keys = iter(jax.random.split(jax.random.PRNGKey(0), 32))

    def w(shape, scale=0.05):
        return jax.random.normal(next(keys), shape, dtype=jnp.float32) * scale

    params = {
        "num_heads": N_HEADS,
        "max_rel": MAX_REL,
        # SelfAttention projections (weights stored as [in, out] = PyTorch W^T)
        "q_w": w((H, H)), "q_b": w((H,), 0.01),
        "k_w": w((H, H)), "k_b": w((H,), 0.01),
        "v_w": w((H, H)), "v_b": w((H,), 0.01),
        # MHA inner projections + output projection
        "fcq_w": w((H, H)), "fcq_b": w((H,), 0.01),
        "fck_w": w((H, H)), "fck_b": w((H,), 0.01),
        "fcv_w": w((H, H)), "fcv_b": w((H,), 0.01),
        "fco_w": w((H, H)), "fco_b": w((H,), 0.01),
        # RelativePosition tables [(2*max+1), head_dim]
        "rel_k": w((2 * MAX_REL + 1, d), 0.3),
        "rel_v": w((2 * MAX_REL + 1, d), 0.3),
        # SelfOutput
        "so_w": w((H, H)), "so_b": w((H,), 0.01),
        "so_g": jnp.ones((H,), jnp.float32), "so_be": jnp.zeros((H,), jnp.float32),
        # Intermediate / Output
        "int_w": w((H, I_SZ)), "int_b": w((I_SZ,), 0.01),
        "out_w": w((I_SZ, H)), "out_b": w((H,), 0.01),
        "out_g": jnp.ones((H,), jnp.float32), "out_be": jnp.zeros((H,), jnp.float32),
    }

    hidden_states = jax.random.normal(next(keys), (B, S, H), dtype=jnp.float32)
    attention_mask = jnp.ones((B, S), dtype=jnp.float32)  # unused, as in the PyTorch module

    out = encoder_forward(params, hidden_states, attention_mask)
    out = jax.block_until_ready(out)
    assert out.shape == (B, S, H)

    ref = reference_encoder(params, hidden_states)
    max_err = float(jnp.max(jnp.abs(out - ref)))
    assert jnp.allclose(out, ref, atol=1e-3, rtol=1e-3), f"mismatch vs reference (max abs err {max_err})"

    print("KERNEL_OK")
</pallas_src>

<mosaic_0001>
module attributes {stable_mosaic.version = 11 : i64} {
  func.func @_linear_kernel(%arg0: i32, %arg1: memref<16x32xf32, #tpu.memory_space<vmem>>, %arg2: memref<32x32xf32, #tpu.memory_space<vmem>>, %arg3: memref<1x32xf32, #tpu.memory_space<vmem>>, %arg4: memref<16x32xf32, #tpu.memory_space<vmem>>) attributes {dimension_semantics = [#tpu.dimension_semantics<parallel>], iteration_bounds = array<i64: 1>, scalar_prefetch = 0 : i64, scratch_operands = 0 : i64, tpu.core_type = #tpu.core_type<tc>, window_params = [{transform_indices = @transform_0, window_bounds = array<i64: 16, 32>}, {pipeline_mode = #tpu.pipeline_mode<synchronous>, transform_indices = @transform_1, window_bounds = array<i64: 32, 32>}, {pipeline_mode = #tpu.pipeline_mode<synchronous>, transform_indices = @transform_2, window_bounds = array<i64: 1, 32>}, {transform_indices = @transform_3, window_bounds = array<i64: 16, 32>}]} {
    %c0 = arith.constant 0 : index
    %c0_0 = arith.constant 0 : index
    %0 = vector.load %arg1[%c0, %c0_0] : memref<16x32xf32, #tpu.memory_space<vmem>>, vector<16x32xf32>
    %c0_1 = arith.constant 0 : index
    %c0_2 = arith.constant 0 : index
    %1 = vector.load %arg2[%c0_1, %c0_2] : memref<32x32xf32, #tpu.memory_space<vmem>>, vector<32x32xf32>
    %cst = arith.constant dense<0.000000e+00> : vector<16x32xf32>
    %2 = tpu.matmul %0, %1, %cst {dimension_numbers = #tpu.dot_dimension_numbers<[1], [0], [0], [1], [0, 0, 1, 1], [], []>} : vector<16x32xf32>, vector<32x32xf32>, vector<16x32xf32> -> vector<16x32xf32>
    %c0_3 = arith.constant 0 : index
    %c0_4 = arith.constant 0 : index
    %3 = vector.load %arg3[%c0_3, %c0_4] : memref<1x32xf32, #tpu.memory_space<vmem>>, vector<1x32xf32>
    %4 = vector.broadcast %3 : vector<1x32xf32> to vector<16x32xf32>
    %5 = arith.addf %2, %4 : vector<16x32xf32>
    %c0_5 = arith.constant 0 : index
    %c0_6 = arith.constant 0 : index
    %6 = vector.load %arg4[%c0_5, %c0_6] : memref<16x32xf32, #tpu.memory_space<vmem>>, vector<16x32xf32>
    tpu.vector_store %arg4[%c0_5, %c0_6], %5 {strides = array<i32>} : memref<16x32xf32, #tpu.memory_space<vmem>>, vector<16x32xf32>,
    return
  }
  func.func @transform_0(%arg0: i32) -> (i32, i32) {
    %c0_i32 = arith.constant 0 : i32
    %c0_i32_0 = arith.constant 0 : i32
    return %arg0, %c0_i32 : i32, i32
  }
  func.func @transform_1(%arg0: i32) -> (i32, i32) {
    %c0_i32 = arith.constant 0 : i32
    %c0_i32_0 = arith.constant 0 : i32
    %c0_i32_1 = arith.constant 0 : i32
    return %c0_i32, %c0_i32_0 : i32, i32
  }
  func.func @transform_2(%arg0: i32) -> (i32, i32) {
    %c0_i32 = arith.constant 0 : i32
    %c0_i32_0 = arith.constant 0 : i32
    %c0_i32_1 = arith.constant 0 : i32
    return %c0_i32, %c0_i32_0 : i32, i32
  }
  func.func @transform_3(%arg0: i32) -> (i32, i32) {
    %c0_i32 = arith.constant 0 : i32
    %c0_i32_0 = arith.constant 0 : i32
    return %arg0, %c0_i32 : i32, i32
  }
}

</mosaic_0001>

<llo_original>
// kernel: tpu_custom_call.1
$region0: #{tpu_custom_call.1}
  #allocation0 [shape = 'u32[]', space=smem, size = 0x4, offset = 0x4, fixed_abs, tag = 'smem constant byte address 0x4 - core index']
  #allocation1 [shape = 'u32[72,128]{1,0:T(1,128)}', space=vmem, size = 0x9000, scoped, tag = 'internal scratch']
  %s0 = inlined_call_operand.hbm [shape: f32[16,32], index: 0, kind: input, shape index: {}]
  %s1 = inlined_call_operand.hbm [shape: f32[32,32], index: 1, kind: input, shape index: {}]
  %s2 = inlined_call_operand.vmem [shape: f32[1,32], index: 2, kind: input, shape index: {}]
  %s3 = inlined_call_operand.hbm [shape: f32[16,32], index: 3, kind: output, shape index: {}]
  %s4 = sld [smem:[#allocation0]]
  $region30: #{tpu_custom_call.1} parent=0
    _
  %s6 = ssub.s32 1, %s4
  %s7 = scalar_select 0, %s6, %s4
  $region1: #{tpu_custom_call.1} parent=0
    #allocation2 [shape = 'u8[8192]{0}', space=vmem, size = 0x2000, scoped, tag = 'input window, operand 0, single buffered']
    #allocation3 [shape = 's32[1]{0}', space=sflag, size = 0x4, scoped, tag = 'scoped memory for tpu_custom_call.1']
    #allocation4 [shape = 's32[1]{0}', space=sflag, size = 0x4, scoped, tag = 'scoped memory for tpu_custom_call.1']
    #allocation5 [shape = 'u8[16384]{0}', space=vmem, size = 0x4000, scoped, tag = 'input window, operand 1, single buffered']
    #allocation6 [shape = 's32[1]{0}', space=sflag, size = 0x4, scoped, tag = 'scoped memory for tpu_custom_call.1']
    #allocation7 [shape = 'u8[8192]{0}', space=vmem, size = 0x2000, scoped, tag = 'output window, operand 0, single buffered']
    %8 = vsyncpa [#allocation3], 0
    %9 = vsyncpa [#allocation6], 0
    %10 = vsyncpa [#allocation4], 0
    // Predicated region
    $region2: #{tpu_custom_call.1} parent=1 // pred_check
      _
    $region3: #{tpu_custom_call.1} parent=1 // pred_check_branch
      %12 = sbr.rel (0) target = $region5
    $region4: #{tpu_custom_call.1} parent=1 // pred_region
      %14 = vsyncadd [#allocation3], 0
      %s15 = sshll.u32 %s0, 4
      %s16 = int_to_ptr.hbm [resolvable:$true] %s15
      %s17 = sshll.u32 [#allocation2], 4
      %s18 = int_to_ptr.vmem [resolvable:$true] %s17
      %23 = dma.hbm_to_vmem [thread:$0]  %s16, 256, %s18, [#allocation3], 128, 128, 8
    $region5: #{tpu_custom_call.1} parent=1 // pred_fallthru
      _
    // Predicated region
    $region6: #{tpu_custom_call.1} parent=1 // pred_check
      _
    $region7: #{tpu_custom_call.1} parent=1 // pred_check_branch
      %25 = sbr.rel (0) target = $region9
    $region8: #{tpu_custom_call.1} parent=1 // pred_region
      %27 = vsyncadd [#allocation6], 0
      %s28 = sshll.u32 %s1, 4
      %s29 = int_to_ptr.hbm [resolvable:$true] %s28
      %s30 = sshll.u32 [#allocation5], 4
      %s31 = int_to_ptr.vmem [resolvable:$true] %s30
      %36 = dma.hbm_to_vmem [thread:$0]  %s29, 512, %s31, [#allocation6], 128, 128, 8
    $region9: #{tpu_custom_call.1} parent=1 // pred_fallthru
      _
    // Predicated region
    $region10: #{tpu_custom_call.1} parent=1 // pred_check
      _
    $region11: #{tpu_custom_call.1} parent=1 // pred_check_branch
      %38 = sbr.rel (0) target = $region13
    $region12: #{tpu_custom_call.1} parent=1 // pred_region
      _
    $region13: #{tpu_custom_call.1} parent=1 // pred_fallthru
      _
    // Predicated region
    $region14: #{tpu_custom_call.1} parent=1 // pred_check
      _
    $region15: #{tpu_custom_call.1} parent=1 // pred_check_branch
      %40 = sbr.rel (0) target = $region17
    $region16: #{tpu_custom_call.1} parent=1 // pred_region
      %42 = dma.done [#allocation3], 256
    $region17: #{tpu_custom_call.1} parent=1 // pred_fallthru
      _
    // Predicated region
    $region18: #{tpu_custom_call.1} parent=1 // pred_check
      _
    $region19: #{tpu_custom_call.1} parent=1 // pred_check_branch
      %44 = sbr.rel (0) target = $region21
    $region20: #{tpu_custom_call.1} parent=1 // pred_region
      %46 = dma.done [#allocation6], 512
    $region21: #{tpu_custom_call.1} parent=1 // pred_fallthru
      _
    %v47 = vld [vmem:[#allocation2] sm:$0xff]
    %v48 = vld [vmem:[#allocation2 + $0x8] sm:$0xff]
    %v49 = vld [vmem:[#allocation5] sm:$0xff]
    %v50 = vld [vmem:[#allocation5 + $0x8] sm:$0xff]
    %v51 = vld [vmem:[#allocation5 + $0x10] sm:$0xff]
    %v52 = vld [vmem:[#allocation5 + $0x18] sm:$0xff]
    %v53 = vld [vmem:[%s2] sm:$0x1]
    %v55 = vperm.slane %v53, 0
    %vm57 = vcmask 261120
    %v59 = vsel %vm57, %v47, 0
    %v62 = vsel %vm57, %v48, 0
    %64 = vmatpush.msra.mxu0 0.0
    %65 = vmatpush.msra.mxu0 0.0
    %66 = vmatpush.msra.mxu0 0.0
    %67 = vmatpush.msra.mxu0 0.0
    %68 = vmatpush.msra.mxu0 0.0
    %69 = vmatpush.msra.mxu0 0.0
    %70 = vmatpush.msra.mxu0 0.0
    %71 = vmatpush.msra.mxu0 0.0
    %72 = vmatpush.msra.mxu0 0.0
    %73 = vmatpush.msra.mxu0 0.0
    %74 = vmatpush.msra.mxu0 0.0
    %75 = vmatpush.msra.mxu0 0.0
    %76 = vmatpush.msra.mxu0 %v52
    %77 = vmatpush.msra.mxu0 %v51
    %78 = vmatpush.msra.mxu0 %v50
    %79 = vmatpush.msra.mxu0 %v49
    %80 = vmatmul.f32.gmra.mxu0 %v59
    %v81 = vpop.f32.mrf.mxu0
    %v82 = vadd.f32 %v55, %v81
    %83 = vmatmul.f32.gmra.mxu0 %v62
    %v84 = vpop.f32.mrf.mxu0
    %v85 = vadd.f32 %v55, %v84
    %86 = vdwg.mxu0
    %87 = vst.msk [vmem:[#allocation7] sm:$0xff] %vm57, %v82
    %88 = vst.msk [vmem:[#allocation7 + $0x8] sm:$0xff] %vm57, %v85
    // Predicated region
    $region22: #{tpu_custom_call.1} parent=1 // pred_check
      _
    $region23: #{tpu_custom_call.1} parent=1 // pred_check_branch
      %90 = sbr.rel (0) target = $region25
    $region24: #{tpu_custom_call.1} parent=1 // pred_region
      %92 = vsyncadd [#allocation4], 0
      %s93 = sshll.u32 [#allocation7], 4
      %s94 = int_to_ptr.vmem [resolvable:$true] %s93
      %s95 = sshll.u32 %s3, 4
      %s96 = int_to_ptr.hbm [resolvable:$true] %s95
      %101 = dma.vmem_to_hbm [thread:$0]  %s94, 256, %s96, [#allocation4], 128, 128, 8
    $region25: #{tpu_custom_call.1} parent=1 // pred_fallthru
      _
    // Predicated region
    $region26: #{tpu_custom_call.1} parent=1 // pred_check
      _
    $region27: #{tpu_custom_call.1} parent=1 // pred_check_branch
      %103 = sbr.rel (0) target = $region29
    $region28: #{tpu_custom_call.1} parent=1 // pred_region
      %105 = dma.done [#allocation4], 256
    $region29: #{tpu_custom_call.1} parent=1 // pred_fallthru
      _
    %106 = vsyncpa [#allocation3], 1
    %107 = vsyncpa [#allocation6], 1
    %108 = vsyncpa [#allocation4], 1

</llo_original>
